<compile_context>
chip_gen: v6e
topology: v6e:2x2x1
jax: 0.10.0
libtpu: 0.0.40
codegen_flags: <defaults>
</compile_context>

<pallas_src>
import jax
import jax.numpy as jnp
from jax.experimental import pallas as pl
from jax.experimental.pallas import tpu as pltpu

DROPOUT_1 = 0.2
DROPOUT_2 = 0.5
NUM_INPUTS = 784
NUM_INPUTS_PAD = 896          # 7 * 128: lane-dense input feature dim
NUM_OUTPUTS = 10
NUM_HIDDENS1 = 256
NUM_HIDDENS2 = 256


def _round_up(v, m):
    return (v + m - 1) // m * m


def _mlp_dropout_kernel(x_ref, w1_ref, b1_ref, w2_ref, b2_ref, w3_ref, b3_ref,
                        n1_ref, n2_ref, o_ref):
    """One [TB, *] batch tile of the dropout MLP.

    x_ref: bf16 [TB, 896]; weights: bf16 [in, out] with the dropout rescale
    1/(1-p) pre-folded into w2/w3; biases f32.  Matmuls accumulate in f32 on
    the MXU; relu / mask selection stays in f32 (v5e-friendly).
    """
    # ---- layer 1: linear + relu + dropout(0.2)  (rescale folded into w2) ----
    l1 = jnp.dot(x_ref[...], w1_ref[...],
                 preferred_element_type=jnp.float32) + b1_ref[...]
    h1 = jnp.maximum(l1, 0.0)
    h1 = jnp.where(n1_ref[...] > DROPOUT_1, h1, 0.0)

    # ---- layer 2: linear + relu + dropout(0.5)  (rescale folded into w3) ----
    l2 = jnp.dot(h1.astype(jnp.bfloat16), w2_ref[...],
                 preferred_element_type=jnp.float32) + b2_ref[...]
    h2 = jnp.maximum(l2, 0.0)
    h2 = jnp.where(n2_ref[...] > DROPOUT_2, h2, 0.0)

    # ---- layer 3: logits ----
    out = jnp.dot(h2.astype(jnp.bfloat16), w3_ref[...],
                  preferred_element_type=jnp.float32) + b3_ref[...]
    o_ref[...] = out.astype(o_ref.dtype)


def mlp_dropout_forward(x, kparams, noise1, noise2, *, tb_max=512):
    """x: [..., 784] f32 (reshaped to [-1, 784] like the reference).
    kparams: output of prepare_params(). noise*: f32 Gaussian dropout noise."""
    x = x.reshape(-1, NUM_INPUTS)
    B = x.shape[0]

    # Batch tile: multiple of 16 (bf16 sublane pack), capped at tb_max rows so
    # double-buffered {x, noise, out} tiles + ~0.6 MiB resident bf16 weights
    # stay far below even the v7x 64 MiB VMEM.
    TB = min(tb_max, _round_up(B, 16))
    B_pad = _round_up(B, TB)
    grid = (B_pad // TB,)

    xp = jnp.pad(x, ((0, B_pad - B), (0, NUM_INPUTS_PAD - NUM_INPUTS)))
    xp = xp.astype(jnp.bfloat16)
    n1 = jnp.pad(noise1, ((0, B_pad - B), (0, 0))).astype(jnp.float32)
    n2 = jnp.pad(noise2, ((0, B_pad - B), (0, 0))).astype(jnp.float32)

    def tile_spec(cols):                      # batch-tiled arrays
        return pl.BlockSpec((TB, cols), lambda i: (i, 0))

    def const_spec(rows, cols):               # VMEM-resident weights / biases
        return pl.BlockSpec((rows, cols), lambda i: (0, 0))

    out = pl.pallas_call(
        _mlp_dropout_kernel,
        out_shape=jax.ShapeDtypeStruct((B_pad, NUM_OUTPUTS), jnp.float32),
        grid=grid,
        in_specs=[
            tile_spec(NUM_INPUTS_PAD),                   # x
            const_spec(NUM_INPUTS_PAD, NUM_HIDDENS1),    # w1
            const_spec(1, NUM_HIDDENS1),                 # b1
            const_spec(NUM_HIDDENS1, NUM_HIDDENS2),      # w2
            const_spec(1, NUM_HIDDENS2),                 # b2
            const_spec(NUM_HIDDENS2, NUM_OUTPUTS),       # w3
            const_spec(1, NUM_OUTPUTS),                  # b3
            tile_spec(NUM_HIDDENS1),                     # noise1
            tile_spec(NUM_HIDDENS2),                     # noise2
        ],
        out_specs=tile_spec(NUM_OUTPUTS),
        compiler_params=pltpu.CompilerParams(
            dimension_semantics=("parallel",)),
    )(xp, kparams["w1"], kparams["b1"], kparams["w2"], kparams["b2"],
      kparams["w3"], kparams["b3"], n1, n2)

    return out[:B]


def init_params(key):
    """PyTorch nn.Linear-style init: W [out, in], b [out], U(+/- 1/sqrt(fan_in))."""
    ks = jax.random.split(key, 6)

    def linear_init(kw, kb, fan_in, fan_out):
        bound = 1.0 / jnp.sqrt(fan_in)
        w = jax.random.uniform(kw, (fan_out, fan_in), jnp.float32, -bound, bound)
        b = jax.random.uniform(kb, (fan_out,), jnp.float32, -bound, bound)
        return w, b

    w1, b1 = linear_init(ks[0], ks[1], NUM_INPUTS, NUM_HIDDENS1)
    w2, b2 = linear_init(ks[2], ks[3], NUM_HIDDENS1, NUM_HIDDENS2)
    w3, b3 = linear_init(ks[4], ks[5], NUM_HIDDENS2, NUM_OUTPUTS)
    return {"w1": w1, "b1": b1, "w2": w2, "b2": b2, "w3": w3, "b3": b3}


def prepare_params(params):
    """One-time transform of PyTorch-layout f32 params into kernel params:
      * transpose W to [in, out] so the kernel does plain x @ W on the MXU,
      * zero-pad w1's input dim 784 -> 896 (matches padded x),
      * fold the dropout rescale 1/(1-p) into the *next* layer's weights
        (1/0.8 = 1.25 and 1/0.5 = 2.0 are exact in bf16),
      * cast weights to bf16; biases stay f32 with a leading broadcast dim.
    """
    w1 = jnp.pad(params["w1"].T, ((0, NUM_INPUTS_PAD - NUM_INPUTS), (0, 0)))
    w2 = params["w2"].T * (1.0 / (1.0 - DROPOUT_1))
    w3 = params["w3"].T * (1.0 / (1.0 - DROPOUT_2))
    return {
        "w1": w1.astype(jnp.bfloat16),
        "w2": w2.astype(jnp.bfloat16),
        "w3": w3.astype(jnp.bfloat16),
        "b1": params["b1"].reshape(1, -1).astype(jnp.float32),
        "b2": params["b2"].reshape(1, -1).astype(jnp.float32),
        "b3": params["b3"].reshape(1, -1).astype(jnp.float32),
    }


if __name__ == "__main__":
    key = jax.random.PRNGKey(0)
    kp, kx, kn1, kn2 = jax.random.split(key, 4)

    batch = 2
    params = init_params(kp)          # PyTorch-layout f32 params (reference)
    kparams = prepare_params(params)  # kernel-layout bf16 params

    x = jax.random.normal(kx, (batch, NUM_INPUTS), jnp.float32)

    # Gaussian noise for the dropout masks (mask = noise > p), drawn
    # deterministically here and compared in-kernel in f32 so the masks are
    # bit-identical to the reference semantics.
    noise1 = jax.random.normal(kn1, (batch, NUM_HIDDENS1), jnp.float32)
    noise2 = jax.random.normal(kn2, (batch, NUM_HIDDENS2), jnp.float32)

    out = mlp_dropout_forward(x, kparams, noise1, noise2)
    out = jax.block_until_ready(out)

    # Pure-f32 JAX reference using the original (PyTorch-layout) params.
    def ref_forward(x, p, n1, n2):
        h1 = jnp.maximum(x @ p["w1"].T + p["b1"], 0.0)
        h1 = (n1 > DROPOUT_1).astype(jnp.float32) * h1 / (1.0 - DROPOUT_1)
        h2 = jnp.maximum(h1 @ p["w2"].T + p["b2"], 0.0)
        h2 = (n2 > DROPOUT_2).astype(jnp.float32) * h2 / (1.0 - DROPOUT_2)
        return h2 @ p["w3"].T + p["b3"]

    ref = ref_forward(x, params, noise1, noise2)
    assert out.shape == (batch, NUM_OUTPUTS)
    # bf16 matmul operands (f32 accumulation) vs pure-f32 reference.
    assert jnp.allclose(out, ref, atol=5e-2, rtol=5e-2), (
        float(jnp.max(jnp.abs(out - ref))))

    print("KERNEL_OK")
</pallas_src>

<mosaic_0001>
module attributes {stable_mosaic.version = 11 : i64} {
  func.func @_mlp_dropout_kernel(%arg0: i32, %arg1: memref<16x896xbf16, #tpu.memory_space<vmem>>, %arg2: memref<896x256xbf16, #tpu.memory_space<vmem>>, %arg3: memref<1x256xf32, #tpu.memory_space<vmem>>, %arg4: memref<256x256xbf16, #tpu.memory_space<vmem>>, %arg5: memref<1x256xf32, #tpu.memory_space<vmem>>, %arg6: memref<256x10xbf16, #tpu.memory_space<vmem>>, %arg7: memref<1x10xf32, #tpu.memory_space<vmem>>, %arg8: memref<16x256xf32, #tpu.memory_space<vmem>>, %arg9: memref<16x256xf32, #tpu.memory_space<vmem>>, %arg10: memref<16x10xf32, #tpu.memory_space<vmem>>) attributes {dimension_semantics = [#tpu.dimension_semantics<parallel>], iteration_bounds = array<i64: 1>, scalar_prefetch = 0 : i64, scratch_operands = 0 : i64, tpu.core_type = #tpu.core_type<tc>, window_params = [{transform_indices = @transform_0, window_bounds = array<i64: 16, 896>}, {pipeline_mode = #tpu.pipeline_mode<synchronous>, transform_indices = @transform_1, window_bounds = array<i64: 896, 256>}, {pipeline_mode = #tpu.pipeline_mode<synchronous>, transform_indices = @transform_2, window_bounds = array<i64: 1, 256>}, {pipeline_mode = #tpu.pipeline_mode<synchronous>, transform_indices = @transform_3, window_bounds = array<i64: 256, 256>}, {pipeline_mode = #tpu.pipeline_mode<synchronous>, transform_indices = @transform_4, window_bounds = array<i64: 1, 256>}, {pipeline_mode = #tpu.pipeline_mode<synchronous>, transform_indices = @transform_5, window_bounds = array<i64: 256, 10>}, {pipeline_mode = #tpu.pipeline_mode<synchronous>, transform_indices = @transform_6, window_bounds = array<i64: 1, 10>}, {transform_indices = @transform_7, window_bounds = array<i64: 16, 256>}, {transform_indices = @transform_8, window_bounds = array<i64: 16, 256>}, {transform_indices = @transform_9, window_bounds = array<i64: 16, 10>}]} {
    %c0 = arith.constant 0 : index
    %c0_0 = arith.constant 0 : index
    %0 = vector.load %arg1[%c0, %c0_0] : memref<16x896xbf16, #tpu.memory_space<vmem>>, vector<16x896xbf16>
    %c0_1 = arith.constant 0 : index
    %c0_2 = arith.constant 0 : index
    %1 = vector.load %arg2[%c0_1, %c0_2] : memref<896x256xbf16, #tpu.memory_space<vmem>>, vector<896x256xbf16>
    %cst = arith.constant dense<0.000000e+00> : vector<16x256xf32>
    %2 = tpu.matmul %0, %1, %cst {dimension_numbers = #tpu.dot_dimension_numbers<[1], [0], [0], [1], [0, 0, 1, 1], [], []>} : vector<16x896xbf16>, vector<896x256xbf16>, vector<16x256xf32> -> vector<16x256xf32>
    %c0_3 = arith.constant 0 : index
    %c0_4 = arith.constant 0 : index
    %3 = vector.load %arg3[%c0_3, %c0_4] : memref<1x256xf32, #tpu.memory_space<vmem>>, vector<1x256xf32>
    %4 = vector.broadcast %3 : vector<1x256xf32> to vector<16x256xf32>
    %5 = arith.addf %2, %4 : vector<16x256xf32>
    %cst_5 = arith.constant 0.000000e+00 : f32
    %6 = vector.broadcast %cst_5 : f32 to vector<16x256xf32>
    %7 = arith.maximumf %5, %6 : vector<16x256xf32>
    %c0_6 = arith.constant 0 : index
    %c0_7 = arith.constant 0 : index
    %8 = vector.load %arg8[%c0_6, %c0_7] : memref<16x256xf32, #tpu.memory_space<vmem>>, vector<16x256xf32>
    %cst_8 = arith.constant 2.000000e-01 : f32
    %9 = vector.broadcast %cst_8 : f32 to vector<16x256xf32>
    %10 = arith.cmpf ogt, %8, %9 : vector<16x256xf32>
    %cst_9 = arith.constant 0.000000e+00 : f32
    %11 = vector.broadcast %cst_9 : f32 to vector<16x256xf32>
    %12 = arith.select %10, %7, %11 : vector<16x256xi1>, vector<16x256xf32>
    %13 = arith.truncf %12 : vector<16x256xf32> to vector<16x256xbf16>
    %c0_10 = arith.constant 0 : index
    %c0_11 = arith.constant 0 : index
    %14 = vector.load %arg4[%c0_10, %c0_11] : memref<256x256xbf16, #tpu.memory_space<vmem>>, vector<256x256xbf16>
    %cst_12 = arith.constant dense<0.000000e+00> : vector<16x256xf32>
    %15 = tpu.matmul %13, %14, %cst_12 {dimension_numbers = #tpu.dot_dimension_numbers<[1], [0], [0], [1], [0, 0, 1, 1], [], []>} : vector<16x256xbf16>, vector<256x256xbf16>, vector<16x256xf32> -> vector<16x256xf32>
    %c0_13 = arith.constant 0 : index
    %c0_14 = arith.constant 0 : index
    %16 = vector.load %arg5[%c0_13, %c0_14] : memref<1x256xf32, #tpu.memory_space<vmem>>, vector<1x256xf32>
    %17 = vector.broadcast %16 : vector<1x256xf32> to vector<16x256xf32>
    %18 = arith.addf %15, %17 : vector<16x256xf32>
    %cst_15 = arith.constant 0.000000e+00 : f32
    %19 = vector.broadcast %cst_15 : f32 to vector<16x256xf32>
    %20 = arith.maximumf %18, %19 : vector<16x256xf32>
    %c0_16 = arith.constant 0 : index
    %c0_17 = arith.constant 0 : index
    %21 = vector.load %arg9[%c0_16, %c0_17] : memref<16x256xf32, #tpu.memory_space<vmem>>, vector<16x256xf32>
    %cst_18 = arith.constant 5.000000e-01 : f32
    %22 = vector.broadcast %cst_18 : f32 to vector<16x256xf32>
    %23 = arith.cmpf ogt, %21, %22 : vector<16x256xf32>
    %cst_19 = arith.constant 0.000000e+00 : f32
    %24 = vector.broadcast %cst_19 : f32 to vector<16x256xf32>
    %25 = arith.select %23, %20, %24 : vector<16x256xi1>, vector<16x256xf32>
    %26 = arith.truncf %25 : vector<16x256xf32> to vector<16x256xbf16>
    %c0_20 = arith.constant 0 : index
    %c0_21 = arith.constant 0 : index
    %27 = vector.load %arg6[%c0_20, %c0_21] : memref<256x10xbf16, #tpu.memory_space<vmem>>, vector<256x10xbf16>
    %cst_22 = arith.constant dense<0.000000e+00> : vector<16x10xf32>
    %28 = tpu.matmul %26, %27, %cst_22 {dimension_numbers = #tpu.dot_dimension_numbers<[1], [0], [0], [1], [0, 0, 1, 1], [], []>} : vector<16x256xbf16>, vector<256x10xbf16>, vector<16x10xf32> -> vector<16x10xf32>
    %c0_23 = arith.constant 0 : index
    %c0_24 = arith.constant 0 : index
    %29 = vector.load %arg7[%c0_23, %c0_24] : memref<1x10xf32, #tpu.memory_space<vmem>>, vector<1x10xf32>
    %30 = vector.broadcast %29 : vector<1x10xf32> to vector<16x10xf32>
    %31 = arith.addf %28, %30 : vector<16x10xf32>
    %c0_25 = arith.constant 0 : index
    %c0_26 = arith.constant 0 : index
    %32 = vector.load %arg10[%c0_25, %c0_26] : memref<16x10xf32, #tpu.memory_space<vmem>>, vector<16x10xf32>
    tpu.vector_store %arg10[%c0_25, %c0_26], %31 {strides = array<i32>} : memref<16x10xf32, #tpu.memory_space<vmem>>, vector<16x10xf32>,
    return
  }
  func.func @transform_0(%arg0: i32) -> (i32, i32) {
    %c0_i32 = arith.constant 0 : i32
    %c0_i32_0 = arith.constant 0 : i32
    return %arg0, %c0_i32 : i32, i32
  }
  func.func @transform_1(%arg0: i32) -> (i32, i32) {
    %c0_i32 = arith.constant 0 : i32
    %c0_i32_0 = arith.constant 0 : i32
    %c0_i32_1 = arith.constant 0 : i32
    return %c0_i32, %c0_i32_0 : i32, i32
  }
  func.func @transform_2(%arg0: i32) -> (i32, i32) {
    %c0_i32 = arith.constant 0 : i32
    %c0_i32_0 = arith.constant 0 : i32
    %c0_i32_1 = arith.constant 0 : i32
    return %c0_i32, %c0_i32_0 : i32, i32
  }
  func.func @transform_3(%arg0: i32) -> (i32, i32) {
    %c0_i32 = arith.constant 0 : i32
    %c0_i32_0 = arith.constant 0 : i32
    %c0_i32_1 = arith.constant 0 : i32
    return %c0_i32, %c0_i32_0 : i32, i32
  }
  func.func @transform_4(%arg0: i32) -> (i32, i32) {
    %c0_i32 = arith.constant 0 : i32
    %c0_i32_0 = arith.constant 0 : i32
    %c0_i32_1 = arith.constant 0 : i32
    return %c0_i32, %c0_i32_0 : i32, i32
  }
  func.func @transform_5(%arg0: i32) -> (i32, i32) {
    %c0_i32 = arith.constant 0 : i32
    %c0_i32_0 = arith.constant 0 : i32
    %c0_i32_1 = arith.constant 0 : i32
    return %c0_i32, %c0_i32_0 : i32, i32
  }
  func.func @transform_6(%arg0: i32) -> (i32, i32) {
    %c0_i32 = arith.constant 0 : i32
    %c0_i32_0 = arith.constant 0 : i32
    %c0_i32_1 = arith.constant 0 : i32
    return %c0_i32, %c0_i32_0 : i32, i32
  }
  func.func @transform_7(%arg0: i32) -> (i32, i32) {
    %c0_i32 = arith.constant 0 : i32
    %c0_i32_0 = arith.constant 0 : i32
    return %arg0, %c0_i32 : i32, i32
  }
  func.func @transform_8(%arg0: i32) -> (i32, i32) {
    %c0_i32 = arith.constant 0 : i32
    %c0_i32_0 = arith.constant 0 : i32
    return %arg0, %c0_i32 : i32, i32
  }
  func.func @transform_9(%arg0: i32) -> (i32, i32) {
    %c0_i32 = arith.constant 0 : i32
    %c0_i32_0 = arith.constant 0 : i32
    return %arg0, %c0_i32 : i32, i32
  }
}

</mosaic_0001>

<llo_original>
// kernel: tpu_custom_call.1
$region0: #{tpu_custom_call.1}
  #allocation0 [shape = 'u32[]', space=smem, size = 0x4, offset = 0x4, fixed_abs, tag = 'smem constant byte address 0x4 - core index']
  #allocation1 [shape = 'u32[144,128]{1,0:T(1,128)}', space=vmem, size = 0x12000, scoped, tag = 'internal scratch']
  %s0 = inlined_call_operand.vmem [shape: bf16[16,896], index: 0, kind: input, shape index: {}]
  %s1 = inlined_call_operand.hbm [shape: bf16[896,256], index: 1, kind: input, shape index: {}]
  %s2 = inlined_call_operand.vmem [shape: f32[1,256], index: 2, kind: input, shape index: {}]
  %s3 = inlined_call_operand.hbm [shape: bf16[256,256], index: 3, kind: input, shape index: {}]
  %s4 = inlined_call_operand.vmem [shape: f32[1,256], index: 4, kind: input, shape index: {}]
  %s5 = inlined_call_operand.vmem [shape: bf16[256,10], index: 5, kind: input, shape index: {}]
  %s6 = inlined_call_operand.vmem [shape: f32[1,10], index: 6, kind: input, shape index: {}]
  %s7 = inlined_call_operand.vmem [shape: f32[16,256], index: 7, kind: input, shape index: {}]
  %s8 = inlined_call_operand.vmem [shape: f32[16,256], index: 8, kind: input, shape index: {}]
  %s9 = inlined_call_operand.hbm [shape: f32[16,10], index: 9, kind: output, shape index: {}]
  %s10 = sld [smem:[#allocation0]]
  $region54: #{tpu_custom_call.1} parent=0
    _
  %s12 = ssub.s32 1, %s10
  %s13 = scalar_select 0, %s12, %s10
  $region1: #{tpu_custom_call.1} parent=0
    #allocation2 [shape = 'u8[458752]{0}', space=vmem, size = 0x70000, scoped, tag = 'input window, operand 1, single buffered']
    #allocation3 [shape = 's32[1]{0}', space=sflag, size = 0x4, scoped, tag = 'scoped memory for tpu_custom_call.1']
    #allocation4 [shape = 's32[1]{0}', space=sflag, size = 0x4, scoped, tag = 'scoped memory for tpu_custom_call.1']
    #allocation5 [shape = 'u8[131072]{0}', space=vmem, size = 0x20000, scoped, tag = 'input window, operand 3, single buffered']
    #allocation6 [shape = 's32[1]{0}', space=sflag, size = 0x4, scoped, tag = 'scoped memory for tpu_custom_call.1']
    #allocation7 [shape = 'u8[8192]{0}', space=vmem, size = 0x2000, scoped, tag = 'output window, operand 0, single buffered']
    %14 = vsyncpa [#allocation3], 0
    %15 = vsyncpa [#allocation6], 0
    %16 = vsyncpa [#allocation4], 0
    // Predicated region
    $region2: #{tpu_custom_call.1} parent=1 // pred_check
      _
    $region3: #{tpu_custom_call.1} parent=1 // pred_check_branch
      %18 = sbr.rel (0) target = $region5
    $region4: #{tpu_custom_call.1} parent=1 // pred_region
      _
    $region5: #{tpu_custom_call.1} parent=1 // pred_fallthru
      _
    // Predicated region
    $region6: #{tpu_custom_call.1} parent=1 // pred_check
      _
    $region7: #{tpu_custom_call.1} parent=1 // pred_check_branch
      %20 = sbr.rel (0) target = $region9
    $region8: #{tpu_custom_call.1} parent=1 // pred_region
      %s22 = ssub.s32 14336, 14336
      %23 = vsyncadd [#allocation3], %s22
      %s24 = sshll.u32 [#allocation2], 4
      %s25 = int_to_ptr.vmem [resolvable:$true] %s24
      %30 = dma.hbm_to_vmem [thread:$0]  %s1, 14336, %s25, [#allocation3], 128, 128, 8
    $region9: #{tpu_custom_call.1} parent=1 // pred_fallthru
      _
    // Predicated region
    $region10: #{tpu_custom_call.1} parent=1 // pred_check
      _
    $region11: #{tpu_custom_call.1} parent=1 // pred_check_branch
      %32 = sbr.rel (0) target = $region13
    $region12: #{tpu_custom_call.1} parent=1 // pred_region
      _
    $region13: #{tpu_custom_call.1} parent=1 // pred_fallthru
      _
    // Predicated region
    $region14: #{tpu_custom_call.1} parent=1 // pred_check
      _
    $region15: #{tpu_custom_call.1} parent=1 // pred_check_branch
      %34 = sbr.rel (0) target = $region17
    $region16: #{tpu_custom_call.1} parent=1 // pred_region
      %s36 = ssub.s32 4096, 4096
      %37 = vsyncadd [#allocation6], %s36
      %s38 = sshll.u32 [#allocation5], 4
      %s39 = int_to_ptr.vmem [resolvable:$true] %s38
      %44 = dma.hbm_to_vmem [thread:$0]  %s3, 4096, %s39, [#allocation6], 128, 128, 8
    $region17: #{tpu_custom_call.1} parent=1 // pred_fallthru
      _
    // Predicated region
    $region18: #{tpu_custom_call.1} parent=1 // pred_check
      _
    $region19: #{tpu_custom_call.1} parent=1 // pred_check_branch
      %46 = sbr.rel (0) target = $region21
    $region20: #{tpu_custom_call.1} parent=1 // pred_region
      _
    $region21: #{tpu_custom_call.1} parent=1 // pred_fallthru
      _
    // Predicated region
    $region22: #{tpu_custom_call.1} parent=1 // pred_check
      _
    $region23: #{tpu_custom_call.1} parent=1 // pred_check_branch
      %48 = sbr.rel (0) target = $region25
    $region24: #{tpu_custom_call.1} parent=1 // pred_region
      _
    $region25: #{tpu_custom_call.1} parent=1 // pred_fallthru
      _
    // Predicated region
    $region26: #{tpu_custom_call.1} parent=1 // pred_check
      _
    $region27: #{tpu_custom_call.1} parent=1 // pred_check_branch
      %50 = sbr.rel (0) target = $region29
    $region28: #{tpu_custom_call.1} parent=1 // pred_region
      _
    $region29: #{tpu_custom_call.1} parent=1 // pred_fallthru
      _
    // Predicated region
    $region30: #{tpu_custom_call.1} parent=1 // pred_check
      _
    $region31: #{tpu_custom_call.1} parent=1 // pred_check_branch
      %52 = sbr.rel (0) target = $region33
    $region32: #{tpu_custom_call.1} parent=1 // pred_region
      _
    $region33: #{tpu_custom_call.1} parent=1 // pred_fallthru
      _
    // Predicated region
    $region34: #{tpu_custom_call.1} parent=1 // pred_check
      _
    $region35: #{tpu_custom_call.1} parent=1 // pred_check_branch
      %54 = sbr.rel (0) target = $region37
    $region36: #{tpu_custom_call.1} parent=1 // pred_region
      _
    $region37: #{tpu_custom_call.1} parent=1 // pred_fallthru
      _
    // Predicated region
    $region38: #{tpu_custom_call.1} parent=1 // pred_check
      _
    $region39: #{tpu_custom_call.1} parent=1 // pred_check_branch
      %56 = sbr.rel (0) target = $region41
    $region40: #{tpu_custom_call.1} parent=1 // pred_region
      %57 = dma.done [#allocation3], 14336
    $region41: #{tpu_custom_call.1} parent=1 // pred_fallthru
      _
    // Predicated region
    $region42: #{tpu_custom_call.1} parent=1 // pred_check
      _
    $region43: #{tpu_custom_call.1} parent=1 // pred_check_branch
      %59 = sbr.rel (0) target = $region45
    $region44: #{tpu_custom_call.1} parent=1 // pred_region
      %60 = dma.done [#allocation6], 4096
    $region45: #{tpu_custom_call.1} parent=1 // pred_fallthru
      _
    %v62 = vld [vmem:[%s0] sm:$0xff]
    %v63 = vld [vmem:[%s0 + $0x8] sm:$0xff]
    %v64 = vld [vmem:[%s0 + $0x10] sm:$0xff]
    %v65 = vld [vmem:[%s0 + $0x18] sm:$0xf]
    %v66 = vld [vmem:[%s0 + $0x1c] sm:$0xff]
    %v67 = vld [vmem:[%s0 + $0x24] sm:$0xff]
    %v68 = vld [vmem:[%s0 + $0x2c] sm:$0xff]
    %v69 = vld [vmem:[%s0 + $0x34] sm:$0xf]
    %v70 = vld [vmem:[#allocation2] sm:$0xff]
    %v71 = vld [vmem:[#allocation2 + $0x8] sm:$0xff]
    %v72 = vld [vmem:[#allocation2 + $0x10] sm:$0xff]
    %v73 = vld [vmem:[#allocation2 + $0x18] sm:$0xff]
    %v74 = vld [vmem:[#allocation2 + $0x20] sm:$0xff]
    %v75 = vld [vmem:[#allocation2 + $0x28] sm:$0xff]
    %v76 = vld [vmem:[#allocation2 + $0x30] sm:$0xff]
    %v77 = vld [vmem:[#allocation2 + $0x38] sm:$0xff]
    %v78 = vld [vmem:[#allocation2 + $0x40] sm:$0xff]
    %v79 = vld [vmem:[#allocation2 + $0x48] sm:$0xff]
    %v80 = vld [vmem:[#allocation2 + $0x50] sm:$0xff]
    %v81 = vld [vmem:[#allocation2 + $0x58] sm:$0xff]
    %v82 = vld [vmem:[#allocation2 + $0x60] sm:$0xff]
    %v83 = vld [vmem:[#allocation2 + $0x68] sm:$0xff]
    %v84 = vld [vmem:[#allocation2 + $0x70] sm:$0xff]
    %v85 = vld [vmem:[#allocation2 + $0x78] sm:$0xff]
    %v86 = vld [vmem:[#allocation2 + $0x80] sm:$0xff]
    %v87 = vld [vmem:[#allocation2 + $0x88] sm:$0xff]
    %v88 = vld [vmem:[#allocation2 + $0x90] sm:$0xff]
    %v89 = vld [vmem:[#allocation2 + $0x98] sm:$0xff]
    %v90 = vld [vmem:[#allocation2 + $0xa0] sm:$0xff]
    %v91 = vld [vmem:[#allocation2 + $0xa8] sm:$0xff]
    %v92 = vld [vmem:[#allocation2 + $0xb0] sm:$0xff]
    %v93 = vld [vmem:[#allocation2 + $0xb8] sm:$0xff]
    %v94 = vld [vmem:[#allocation2 + $0xc0] sm:$0xff]
    %v95 = vld [vmem:[#allocation2 + $0xc8] sm:$0xff]
    %v96 = vld [vmem:[#allocation2 + $0xd0] sm:$0xff]
    %v97 = vld [vmem:[#allocation2 + $0xd8] sm:$0xff]
    %v98 = vld [vmem:[#allocation2 + $0xe0] sm:$0xff]
    %v99 = vld [vmem:[#allocation2 + $0xe8] sm:$0xff]
    %v100 = vld [vmem:[#allocation2 + $0xf0] sm:$0xff]
    %v101 = vld [vmem:[#allocation2 + $0xf8] sm:$0xff]
    %v102 = vld [vmem:[#allocation2 + $0x100] sm:$0xff]
    %v103 = vld [vmem:[#allocation2 + $0x108] sm:$0xff]
    %v104 = vld [vmem:[#allocation2 + $0x110] sm:$0xff]
    %v105 = vld [vmem:[#allocation2 + $0x118] sm:$0xff]
    %v106 = vld [vmem:[#allocation2 + $0x120] sm:$0xff]
    %v107 = vld [vmem:[#allocation2 + $0x128] sm:$0xff]
    %v108 = vld [vmem:[#allocation2 + $0x130] sm:$0xff]
    %v109 = vld [vmem:[#allocation2 + $0x138] sm:$0xff]
    %v110 = vld [vmem:[#allocation2 + $0x140] sm:$0xff]
    %v111 = vld [vmem:[#allocation2 + $0x148] sm:$0xff]
    %v112 = vld [vmem:[#allocation2 + $0x150] sm:$0xff]
    %v113 = vld [vmem:[#allocation2 + $0x158] sm:$0xff]
    %v114 = vld [vmem:[#allocation2 + $0x160] sm:$0xff]
    %v115 = vld [vmem:[#allocation2 + $0x168] sm:$0xff]
    %v116 = vld [vmem:[#allocation2 + $0x170] sm:$0xff]
    %v117 = vld [vmem:[#allocation2 + $0x178] sm:$0xff]
    %v118 = vld [vmem:[#allocation2 + $0x180] sm:$0xff]
    %v119 = vld [vmem:[#allocation2 + $0x188] sm:$0xff]
    %v120 = vld [vmem:[#allocation2 + $0x190] sm:$0xff]
    %v121 = vld [vmem:[#allocation2 + $0x198] sm:$0xff]
    %v122 = vld [vmem:[#allocation2 + $0x1a0] sm:$0xff]
    %v123 = vld [vmem:[#allocation2 + $0x1a8] sm:$0xff]
    %v124 = vld [vmem:[#allocation2 + $0x1b0] sm:$0xff]
    %v125 = vld [vmem:[#allocation2 + $0x1b8] sm:$0xff]
    %v126 = vld [vmem:[#allocation2 + $0x1c0] sm:$0xff]
    %v127 = vld [vmem:[#allocation2 + $0x1c8] sm:$0xff]
    %v128 = vld [vmem:[#allocation2 + $0x1d0] sm:$0xff]
    %v129 = vld [vmem:[#allocation2 + $0x1d8] sm:$0xff]
    %v130 = vld [vmem:[#allocation2 + $0x1e0] sm:$0xff]
    %v131 = vld [vmem:[#allocation2 + $0x1e8] sm:$0xff]
    %v132 = vld [vmem:[#allocation2 + $0x1f0] sm:$0xff]
    %v133 = vld [vmem:[#allocation2 + $0x1f8] sm:$0xff]
    %v134 = vld [vmem:[#allocation2 + $0x200] sm:$0xff]
    %v135 = vld [vmem:[#allocation2 + $0x208] sm:$0xff]
    %v136 = vld [vmem:[#allocation2 + $0x210] sm:$0xff]
    %v137 = vld [vmem:[#allocation2 + $0x218] sm:$0xff]
    %v138 = vld [vmem:[#allocation2 + $0x220] sm:$0xff]
    %v139 = vld [vmem:[#allocation2 + $0x228] sm:$0xff]
    %v140 = vld [vmem:[#allocation2 + $0x230] sm:$0xff]
    %v141 = vld [vmem:[#allocation2 + $0x238] sm:$0xff]
    %v142 = vld [vmem:[#allocation2 + $0x240] sm:$0xff]
    %v143 = vld [vmem:[#allocation2 + $0x248] sm:$0xff]
    %v144 = vld [vmem:[#allocation2 + $0x250] sm:$0xff]
    %v145 = vld [vmem:[#allocation2 + $0x258] sm:$0xff]
    %v146 = vld [vmem:[#allocation2 + $0x260] sm:$0xff]
    %v147 = vld [vmem:[#allocation2 + $0x268] sm:$0xff]
    %v148 = vld [vmem:[#allocation2 + $0x270] sm:$0xff]
    %v149 = vld [vmem:[#allocation2 + $0x278] sm:$0xff]
    %v150 = vld [vmem:[#allocation2 + $0x280] sm:$0xff]
    %v151 = vld [vmem:[#allocation2 + $0x288] sm:$0xff]
    %v152 = vld [vmem:[#allocation2 + $0x290] sm:$0xff]
    %v153 = vld [vmem:[#allocation2 + $0x298] sm:$0xff]
    %v154 = vld [vmem:[#allocation2 + $0x2a0] sm:$0xff]
    %v155 = vld [vmem:[#allocation2 + $0x2a8] sm:$0xff]
    %v156 = vld [vmem:[#allocation2 + $0x2b0] sm:$0xff]
    %v157 = vld [vmem:[#allocation2 + $0x2b8] sm:$0xff]
    %v158 = vld [vmem:[#allocation2 + $0x2c0] sm:$0xff]
    %v159 = vld [vmem:[#allocation2 + $0x2c8] sm:$0xff]
    %v160 = vld [vmem:[#allocation2 + $0x2d0] sm:$0xff]
    %v161 = vld [vmem:[#allocation2 + $0x2d8] sm:$0xff]
    %v162 = vld [vmem:[#allocation2 + $0x2e0] sm:$0xff]
    %v163 = vld [vmem:[#allocation2 + $0x2e8] sm:$0xff]
    %v164 = vld [vmem:[#allocation2 + $0x2f0] sm:$0xff]
    %v165 = vld [vmem:[#allocation2 + $0x2f8] sm:$0xff]
    %v166 = vld [vmem:[#allocation2 + $0x300] sm:$0xff]
    %v167 = vld [vmem:[#allocation2 + $0x308] sm:$0xff]
    %v168 = vld [vmem:[#allocation2 + $0x310] sm:$0xff]
    %v169 = vld [vmem:[#allocation2 + $0x318] sm:$0xff]
    %v170 = vld [vmem:[#allocation2 + $0x320] sm:$0xff]
    %v171 = vld [vmem:[#allocation2 + $0x328] sm:$0xff]
    %v172 = vld [vmem:[#allocation2 + $0x330] sm:$0xff]
    %v173 = vld [vmem:[#allocation2 + $0x338] sm:$0xff]
    %v174 = vld [vmem:[#allocation2 + $0x340] sm:$0xff]
    %v175 = vld [vmem:[#allocation2 + $0x348] sm:$0xff]
    %v176 = vld [vmem:[#allocation2 + $0x350] sm:$0xff]
    %v177 = vld [vmem:[#allocation2 + $0x358] sm:$0xff]
    %v178 = vld [vmem:[#allocation2 + $0x360] sm:$0xff]
    %v179 = vld [vmem:[#allocation2 + $0x368] sm:$0xff]
    %v180 = vld [vmem:[#allocation2 + $0x370] sm:$0xff]
    %v181 = vld [vmem:[#allocation2 + $0x378] sm:$0xff]
    %v182 = vld [vmem:[%s2] sm:$0x3]
    %v184 = vlaneseq
    %v185 = vshrl.u32 %v184, 7
    %v186 = vsub.s32 0, %v185
    %v187 = vrot.slane %v182, %v186
    %v188 = vlaneseq
    %v189 = vshrl.u32 %v188, 7
    %v190 = vsub.s32 1, %v189
    %v191 = vrot.slane %v182, %v190
    %v202 = vunpack.c.l.b16 %v62
    %v203 = vunpack.c.h.b16 %v62
    %v204 = vunpack.c.l.b16 %v63
    %v205 = vunpack.c.h.b16 %v63
    %v206 = vunpack.c.l.b16 %v64
    %v207 = vunpack.c.h.b16 %v64
    %v208 = vunpack.c.l.b16 %v65
    %v209 = vunpack.c.l.b16 %v66
    %v210 = vunpack.c.h.b16 %v66
    %v211 = vunpack.c.l.b16 %v67
    %v212 = vunpack.c.h.b16 %v67
    %v213 = vunpack.c.l.b16 %v68
    %v214 = vunpack.c.h.b16 %v68
    %v215 = vunpack.c.l.b16 %v69
    %v216 = vpack.c.b16 %v209, %v202
    %v217 = vpack.c.b16 %v210, %v203
    %v218 = vpack.c.b16 %v211, %v204
    %v219 = vpack.c.b16 %v212, %v205
    %v220 = vpack.c.b16 %v213, %v206
    %v221 = vpack.c.b16 %v214, %v207
    %v222 = vpack.c.b16 %v215, %v208
    %v342 = vunpack.c.l.b16 %v70
    %v343 = vunpack.c.h.b16 %v70
    %v344 = vunpack.c.l.b16 %v71
    %v345 = vunpack.c.h.b16 %v71
    %v346 = vunpack.c.l.b16 %v72
    %v347 = vunpack.c.h.b16 %v72
    %v348 = vunpack.c.l.b16 %v73
    %v349 = vunpack.c.h.b16 %v73
    %v350 = vunpack.c.l.b16 %v74
    %v351 = vunpack.c.h.b16 %v74
    %v352 = vunpack.c.l.b16 %v75
    %v353 = vunpack.c.h.b16 %v75
    %v354 = vunpack.c.l.b16 %v76
    %v355 = vunpack.c.h.b16 %v76
    %v356 = vunpack.c.l.b16 %v77
    %v357 = vunpack.c.h.b16 %v77
    %v358 = vunpack.c.l.b16 %v78
    %v359 = vunpack.c.h.b16 %v78
    %v360 = vunpack.c.l.b16 %v79
    %v361 = vunpack.c.h.b16 %v79
    %v362 = vunpack.c.l.b16 %v80
    %v363 = vunpack.c.h.b16 %v80
    %v364 = vunpack.c.l.b16 %v81
    %v365 = vunpack.c.h.b16 %v81
    %v366 = vunpack.c.l.b16 %v82
    %v367 = vunpack.c.h.b16 %v82
    %v368 = vunpack.c.l.b16 %v83
    %v369 = vunpack.c.h.b16 %v83
    %v370 = vunpack.c.l.b16 %v84
    %v371 = vunpack.c.h.b16 %v84
    %v372 = vunpack.c.l.b16 %v85
    %v373 = vunpack.c.h.b16 %v85
    %v374 = vunpack.c.l.b16 %v86
    %v375 = vunpack.c.h.b16 %v86
    %v376 = vunpack.c.l.b16 %v87
    %v377 = vunpack.c.h.b16 %v87
    %v378 = vunpack.c.l.b16 %v88
    %v379 = vunpack.c.h.b16 %v88
    %v380 = vunpack.c.l.b16 %v89
    %v381 = vunpack.c.h.b16 %v89
    %v382 = vunpack.c.l.b16 %v90
    %v383 = vunpack.c.h.b16 %v90
    %v384 = vunpack.c.l.b16 %v91
    %v385 = vunpack.c.h.b16 %v91
    %v386 = vunpack.c.l.b16 %v92
    %v387 = vunpack.c.h.b16 %v92
    %v388 = vunpack.c.l.b16 %v93
    %v389 = vunpack.c.h.b16 %v93
    %v390 = vunpack.c.l.b16 %v94
    %v391 = vunpack.c.h.b16 %v94
    %v392 = vunpack.c.l.b16 %v95
    %v393 = vunpack.c.h.b16 %v95
    %v394 = vunpack.c.l.b16 %v96
    %v395 = vunpack.c.h.b16 %v96
    %v396 = vunpack.c.l.b16 %v97
    %v397 = vunpack.c.h.b16 %v97
    %v398 = vunpack.c.l.b16 %v98
    %v399 = vunpack.c.h.b16 %v98
    %v400 = vunpack.c.l.b16 %v99
    %v401 = vunpack.c.h.b16 %v99
    %v402 = vunpack.c.l.b16 %v100
    %v403 = vunpack.c.h.b16 %v100
    %v404 = vunpack.c.l.b16 %v101
    %v405 = vunpack.c.h.b16 %v101
    %v406 = vunpack.c.l.b16 %v102
    %v407 = vunpack.c.h.b16 %v102
    %v408 = vunpack.c.l.b16 %v103
    %v409 = vunpack.c.h.b16 %v103
    %v410 = vunpack.c.l.b16 %v104
    %v411 = vunpack.c.h.b16 %v104
    %v412 = vunpack.c.l.b16 %v105
    %v413 = vunpack.c.h.b16 %v105
    %v414 = vunpack.c.l.b16 %v106
    %v415 = vunpack.c.h.b16 %v106
    %v416 = vunpack.c.l.b16 %v107
    %v417 = vunpack.c.h.b16 %v107
    %v418 = vunpack.c.l.b16 %v108
    %v419 = vunpack.c.h.b16 %v108
    %v420 = vunpack.c.l.b16 %v109
    %v421 = vunpack.c.h.b16 %v109
    %v422 = vunpack.c.l.b16 %v110
    %v423 = vunpack.c.h.b16 %v110
    %v424 = vunpack.c.l.b16 %v111
    %v425 = vunpack.c.h.b16 %v111
    %v426 = vunpack.c.l.b16 %v112
    %v427 = vunpack.c.h.b16 %v112
    %v428 = vunpack.c.l.b16 %v113
    %v429 = vunpack.c.h.b16 %v113
    %v430 = vunpack.c.l.b16 %v114
    %v431 = vunpack.c.h.b16 %v114
    %v432 = vunpack.c.l.b16 %v115
    %v433 = vunpack.c.h.b16 %v115
    %v434 = vunpack.c.l.b16 %v116
    %v435 = vunpack.c.h.b16 %v116
    %v436 = vunpack.c.l.b16 %v117
    %v437 = vunpack.c.h.b16 %v117
    %v438 = vunpack.c.l.b16 %v118
    %v439 = vunpack.c.h.b16 %v118
    %v440 = vunpack.c.l.b16 %v119
    %v441 = vunpack.c.h.b16 %v119
    %v442 = vunpack.c.l.b16 %v120
    %v443 = vunpack.c.h.b16 %v120
    %v444 = vunpack.c.l.b16 %v121
    %v445 = vunpack.c.h.b16 %v121
    %v446 = vunpack.c.l.b16 %v122
    %v447 = vunpack.c.h.b16 %v122
    %v448 = vunpack.c.l.b16 %v123
    %v449 = vunpack.c.h.b16 %v123
    %v450 = vunpack.c.l.b16 %v124
    %v451 = vunpack.c.h.b16 %v124
    %v452 = vunpack.c.l.b16 %v125
    %v453 = vunpack.c.h.b16 %v125
    %v454 = vunpack.c.l.b16 %v126
    %v455 = vunpack.c.h.b16 %v126
    %v456 = vunpack.c.l.b16 %v127
    %v457 = vunpack.c.h.b16 %v127
    %v458 = vunpack.c.l.b16 %v128
    %v459 = vunpack.c.h.b16 %v128
    %v460 = vunpack.c.l.b16 %v129
    %v461 = vunpack.c.h.b16 %v129
    %v462 = vunpack.c.l.b16 %v130
    %v463 = vunpack.c.h.b16 %v130
    %v464 = vunpack.c.l.b16 %v131
    %v465 = vunpack.c.h.b16 %v131
    %v466 = vunpack.c.l.b16 %v132
    %v467 = vunpack.c.h.b16 %v132
    %v468 = vunpack.c.l.b16 %v133
    %v469 = vunpack.c.h.b16 %v133
    %v470 = vunpack.c.l.b16 %v134
    %v471 = vunpack.c.h.b16 %v134
    %v472 = vunpack.c.l.b16 %v135
    %v473 = vunpack.c.h.b16 %v135
    %v474 = vunpack.c.l.b16 %v136
    %v475 = vunpack.c.h.b16 %v136
    %v476 = vunpack.c.l.b16 %v137
    %v477 = vunpack.c.h.b16 %v137
    %v478 = vunpack.c.l.b16 %v138
    %v479 = vunpack.c.h.b16 %v138
    %v480 = vunpack.c.l.b16 %v139
    %v481 = vunpack.c.h.b16 %v139
    %v482 = vunpack.c.l.b16 %v140
    %v483 = vunpack.c.h.b16 %v140
    %v484 = vunpack.c.l.b16 %v141
    %v485 = vunpack.c.h.b16 %v141
    %v486 = vunpack.c.l.b16 %v142
    %v487 = vunpack.c.h.b16 %v142
    %v488 = vunpack.c.l.b16 %v143
    %v489 = vunpack.c.h.b16 %v143
    %v490 = vunpack.c.l.b16 %v144
    %v491 = vunpack.c.h.b16 %v144
    %v492 = vunpack.c.l.b16 %v145
    %v493 = vunpack.c.h.b16 %v145
    %v494 = vunpack.c.l.b16 %v146
    %v495 = vunpack.c.h.b16 %v146
    %v496 = vunpack.c.l.b16 %v147
    %v497 = vunpack.c.h.b16 %v147
    %v498 = vunpack.c.l.b16 %v148
    %v499 = vunpack.c.h.b16 %v148
    %v500 = vunpack.c.l.b16 %v149
    %v501 = vunpack.c.h.b16 %v149
    %v502 = vunpack.c.l.b16 %v150
    %v503 = vunpack.c.h.b16 %v150
    %v504 = vunpack.c.l.b16 %v151
    %v505 = vunpack.c.h.b16 %v151
    %v506 = vunpack.c.l.b16 %v152
    %v507 = vunpack.c.h.b16 %v152
    %v508 = vunpack.c.l.b16 %v153
    %v509 = vunpack.c.h.b16 %v153
    %v510 = vunpack.c.l.b16 %v154
    %v511 = vunpack.c.h.b16 %v154
    %v512 = vunpack.c.l.b16 %v155
    %v513 = vunpack.c.h.b16 %v155
    %v514 = vunpack.c.l.b16 %v156
    %v515 = vunpack.c.h.b16 %v156
    %v516 = vunpack.c.l.b16 %v157
    %v517 = vunpack.c.h.b16 %v157
    %v518 = vunpack.c.l.b16 %v158
    %v519 = vunpack.c.h.b16 %v158
    %v520 = vunpack.c.l.b16 %v159
    %v521 = vunpack.c.h.b16 %v159
    %v522 = vunpack.c.l.b16 %v160
    %v523 = vunpack.c.h.b16 %v160
    %v524 = vunpack.c.l.b16 %v161
    %v525 = vunpack.c.h.b16 %v161
    %v526 = vunpack.c.l.b16 %v162
    %v527 = vunpack.c.h.b16 %v162
    %v528 = vunpack.c.l.b16 %v163
    %v529 = vunpack.c.h.b16 %v163
    %v530 = vunpack.c.l.b16 %v164
    %v531 = vunpack.c.h.b16 %v164
    %v532 = vunpack.c.l.b16 %v165
    %v533 = vunpack.c.h.b16 %v165
    %v534 = vunpack.c.l.b16 %v166
    %v535 = vunpack.c.h.b16 %v166
    %v536 = vunpack.c.l.b16 %v167
    %v537 = vunpack.c.h.b16 %v167
    %v538 = vunpack.c.l.b16 %v168
    %v539 = vunpack.c.h.b16 %v168
    %v540 = vunpack.c.l.b16 %v169
    %v541 = vunpack.c.h.b16 %v169
    %v542 = vunpack.c.l.b16 %v170
    %v543 = vunpack.c.h.b16 %v170
    %v544 = vunpack.c.l.b16 %v171
    %v545 = vunpack.c.h.b16 %v171
    %v546 = vunpack.c.l.b16 %v172
    %v547 = vunpack.c.h.b16 %v172
    %v548 = vunpack.c.l.b16 %v173
    %v549 = vunpack.c.h.b16 %v173
    %v550 = vunpack.c.l.b16 %v174
    %v551 = vunpack.c.h.b16 %v174
    %v552 = vunpack.c.l.b16 %v175
    %v553 = vunpack.c.h.b16 %v175
    %v554 = vunpack.c.l.b16 %v176
    %v555 = vunpack.c.h.b16 %v176
    %v556 = vunpack.c.l.b16 %v177
    %v557 = vunpack.c.h.b16 %v177
    %v558 = vunpack.c.l.b16 %v178
    %v559 = vunpack.c.h.b16 %v178
    %v560 = vunpack.c.l.b16 %v179
    %v561 = vunpack.c.h.b16 %v179
    %v562 = vunpack.c.l.b16 %v180
    %v563 = vunpack.c.h.b16 %v180
    %v564 = vunpack.c.l.b16 %v181
    %v565 = vunpack.c.h.b16 %v181
    %v566 = vpack.c.b16 %v344, %v342
    %v567 = vpack.c.b16 %v345, %v343
    %v568 = vpack.c.b16 %v348, %v346
    %v569 = vpack.c.b16 %v349, %v347
    %v570 = vpack.c.b16 %v352, %v350
    %v571 = vpack.c.b16 %v353, %v351
    %v572 = vpack.c.b16 %v356, %v354
    %v573 = vpack.c.b16 %v357, %v355
    %v574 = vpack.c.b16 %v360, %v358
    %v575 = vpack.c.b16 %v361, %v359
    %v576 = vpack.c.b16 %v364, %v362
    %v577 = vpack.c.b16 %v365, %v363
    %v578 = vpack.c.b16 %v368, %v366
    %v579 = vpack.c.b16 %v369, %v367
    %v580 = vpack.c.b16 %v372, %v370
    %v581 = vpack.c.b16 %v373, %v371
    %v582 = vpack.c.b16 %v376, %v374
    %v583 = vpack.c.b16 %v377, %v375
    %v584 = vpack.c.b16 %v380, %v378
    %v585 = vpack.c.b16 %v381, %v379
    %v586 = vpack.c.b16 %v384, %v382
    %v587 = vpack.c.b16 %v385, %v383
    %v588 = vpack.c.b16 %v388, %v386
    %v589 = vpack.c.b16 %v389, %v387
    %v590 = vpack.c.b16 %v392, %v390
    %v591 = vpack.c.b16 %v393, %v391
    %v592 = vpack.c.b16 %v396, %v394
    %v593 = vpack.c.b16 %v397, %v395
    %v594 = vpack.c.b16 %v400, %v398
    %v595 = vpack.c.b16 %v401, %v399
    %v596 = vpack.c.b16 %v404, %v402
    %v597 = vpack.c.b16 %v405, %v403
    %v598 = vpack.c.b16 %v408, %v406
    %v599 = vpack.c.b16 %v409, %v407
    %v600 = vpack.c.b16 %v412, %v410
    %v601 = vpack.c.b16 %v413, %v411
    %v602 = vpack.c.b16 %v416, %v414
    %v603 = vpack.c.b16 %v417, %v415
    %v604 = vpack.c.b16 %v420, %v418
    %v605 = vpack.c.b16 %v421, %v419
    %v606 = vpack.c.b16 %v424, %v422
    %v607 = vpack.c.b16 %v425, %v423
    %v608 = vpack.c.b16 %v428, %v426
    %v609 = vpack.c.b16 %v429, %v427
    %v610 = vpack.c.b16 %v432, %v430
    %v611 = vpack.c.b16 %v433, %v431
    %v612 = vpack.c.b16 %v436, %v434
    %v613 = vpack.c.b16 %v437, %v435
    %v614 = vpack.c.b16 %v440, %v438
    %v615 = vpack.c.b16 %v441, %v439
    %v616 = vpack.c.b16 %v444, %v442
    %v617 = vpack.c.b16 %v445, %v443
    %v618 = vpack.c.b16 %v448, %v446
    %v619 = vpack.c.b16 %v449, %v447
    %v620 = vpack.c.b16 %v452, %v450
    %v621 = vpack.c.b16 %v453, %v451
    %v622 = vpack.c.b16 %v456, %v454
    %v623 = vpack.c.b16 %v457, %v455
    %v624 = vpack.c.b16 %v460, %v458
    %v625 = vpack.c.b16 %v461, %v459
    %v626 = vpack.c.b16 %v464, %v462
    %v627 = vpack.c.b16 %v465, %v463
    %v628 = vpack.c.b16 %v468, %v466
    %v629 = vpack.c.b16 %v469, %v467
    %v630 = vpack.c.b16 %v472, %v470
    %v631 = vpack.c.b16 %v473, %v471
    %v632 = vpack.c.b16 %v476, %v474
    %v633 = vpack.c.b16 %v477, %v475
    %v634 = vpack.c.b16 %v480, %v478
    %v635 = vpack.c.b16 %v481, %v479
    %v636 = vpack.c.b16 %v484, %v482
    %v637 = vpack.c.b16 %v485, %v483
    %v638 = vpack.c.b16 %v488, %v486
    %v639 = vpack.c.b16 %v489, %v487
    %v640 = vpack.c.b16 %v492, %v490
    %v641 = vpack.c.b16 %v493, %v491
    %v642 = vpack.c.b16 %v496, %v494
    %v643 = vpack.c.b16 %v497, %v495
    %v644 = vpack.c.b16 %v500, %v498
    %v645 = vpack.c.b16 %v501, %v499
    %v646 = vpack.c.b16 %v504, %v502
    %v647 = vpack.c.b16 %v505, %v503
    %v648 = vpack.c.b16 %v508, %v506
    %v649 = vpack.c.b16 %v509, %v507
    %v650 = vpack.c.b16 %v512, %v510
    %v651 = vpack.c.b16 %v513, %v511
    %v652 = vpack.c.b16 %v516, %v514
    %v653 = vpack.c.b16 %v517, %v515
    %v654 = vpack.c.b16 %v520, %v518
    %v655 = vpack.c.b16 %v521, %v519
    %v656 = vpack.c.b16 %v524, %v522
    %v657 = vpack.c.b16 %v525, %v523
    %v658 = vpack.c.b16 %v528, %v526
    %v659 = vpack.c.b16 %v529, %v527
    %v660 = vpack.c.b16 %v532, %v530
    %v661 = vpack.c.b16 %v533, %v531
    %v662 = vpack.c.b16 %v536, %v534
    %v663 = vpack.c.b16 %v537, %v535
    %v664 = vpack.c.b16 %v540, %v538
    %v665 = vpack.c.b16 %v541, %v539
    %v666 = vpack.c.b16 %v544, %v542
    %v667 = vpack.c.b16 %v545, %v543
    %v668 = vpack.c.b16 %v548, %v546
    %v669 = vpack.c.b16 %v549, %v547
    %v670 = vpack.c.b16 %v552, %v550
    %v671 = vpack.c.b16 %v553, %v551
    %v672 = vpack.c.b16 %v556, %v554
    %v673 = vpack.c.b16 %v557, %v555
    %v674 = vpack.c.b16 %v560, %v558
    %v675 = vpack.c.b16 %v561, %v559
    %v676 = vpack.c.b16 %v564, %v562
    %v677 = vpack.c.b16 %v565, %v563
    %790 = vmatprep.subr.bf16.mxu0 %v581
    %791 = vmatpush1.bf16.msra.mxu0 %v580
    %792 = vmatprep.subr.bf16.mxu0 %v579
    %793 = vmatpush1.bf16.msra.mxu0 %v578
    %794 = vmatprep.subr.bf16.mxu0 %v577
    %795 = vmatpush1.bf16.msra.mxu0 %v576
    %796 = vmatprep.subr.bf16.mxu0 %v575
    %797 = vmatpush1.bf16.msra.mxu0 %v574
    %798 = vmatprep.subr.bf16.mxu0 %v573
    %799 = vmatpush1.bf16.msra.mxu0 %v572
    %800 = vmatprep.subr.bf16.mxu0 %v571
    %801 = vmatpush1.bf16.msra.mxu0 %v570
    %802 = vmatprep.subr.bf16.mxu0 %v569
    %803 = vmatpush1.bf16.msra.mxu0 %v568
    %804 = vmatprep.subr.bf16.mxu0 %v567
    %805 = vmatpush1.bf16.msra.mxu0 %v566
    %806 = vmatprep.subr.bf16.mxu0 %v597
    %807 = vmatpush2.bf16.msra.mxu0 %v596
    %808 = vmatprep.subr.bf16.mxu0 %v595
    %809 = vmatpush2.bf16.msra.mxu0 %v594
    %810 = vmatprep.subr.bf16.mxu0 %v593
    %811 = vmatpush2.bf16.msra.mxu0 %v592
    %812 = vmatprep.subr.bf16.mxu0 %v591
    %813 = vmatpush2.bf16.msra.mxu0 %v590
    %814 = vmatprep.subr.bf16.mxu0 %v589
    %815 = vmatpush2.bf16.msra.mxu0 %v588
    %816 = vmatprep.subr.bf16.mxu0 %v587
    %817 = vmatpush2.bf16.msra.mxu0 %v586
    %818 = vmatprep.subr.bf16.mxu0 %v585
    %819 = vmatpush2.bf16.msra.mxu0 %v584
    %820 = vmatprep.subr.bf16.mxu0 %v583
    %821 = vmatpush2.bf16.msra.mxu0 %v582
    %822 = vmatprep.mubr.bf16.mxu0 %v217
    %823 = vmatmul.mubr.bf16.gmra.mxu0 %v216
    %v824 = vpop.f32.mrf.mxu0
    %v825 = vadd.f32 %v187, %v824
    %v826 = vpop.f32.mrf.mxu0
    %v827 = vadd.f32 %v191, %v826
    %v828 = vpop.f32.mrf.mxu0
    %v829 = vadd.f32 %v187, %v828
    %v830 = vpop.f32.mrf.mxu0
    %v831 = vadd.f32 %v191, %v830
    %832 = vdwg.mxu0
    %833 = vmatprep.subr.bf16.mxu0 %v613
    %834 = vmatpush1.bf16.msra.mxu0 %v612
    %835 = vmatprep.subr.bf16.mxu0 %v611
    %836 = vmatpush1.bf16.msra.mxu0 %v610
    %837 = vmatprep.subr.bf16.mxu0 %v609
    %838 = vmatpush1.bf16.msra.mxu0 %v608
    %839 = vmatprep.subr.bf16.mxu0 %v607
    %840 = vmatpush1.bf16.msra.mxu0 %v606
    %841 = vmatprep.subr.bf16.mxu0 %v605
    %842 = vmatpush1.bf16.msra.mxu0 %v604
    %843 = vmatprep.subr.bf16.mxu0 %v603
    %844 = vmatpush1.bf16.msra.mxu0 %v602
    %845 = vmatprep.subr.bf16.mxu0 %v601
    %846 = vmatpush1.bf16.msra.mxu0 %v600
    %847 = vmatprep.subr.bf16.mxu0 %v599
    %848 = vmatpush1.bf16.msra.mxu0 %v598
    %849 = vmatprep.subr.bf16.mxu0 %v629
    %850 = vmatpush2.bf16.msra.mxu0 %v628
    %851 = vmatprep.subr.bf16.mxu0 %v627
    %852 = vmatpush2.bf16.msra.mxu0 %v626
    %853 = vmatprep.subr.bf16.mxu0 %v625
    %854 = vmatpush2.bf16.msra.mxu0 %v624
    %855 = vmatprep.subr.bf16.mxu0 %v623
    %856 = vmatpush2.bf16.msra.mxu0 %v622
    %857 = vmatprep.subr.bf16.mxu0 %v621
    %858 = vmatpush2.bf16.msra.mxu0 %v620
    %859 = vmatprep.subr.bf16.mxu0 %v619
    %860 = vmatpush2.bf16.msra.mxu0 %v618
    %861 = vmatprep.subr.bf16.mxu0 %v617
    %862 = vmatpush2.bf16.msra.mxu0 %v616
    %863 = vmatprep.subr.bf16.mxu0 %v615
    %864 = vmatpush2.bf16.msra.mxu0 %v614
    %865 = vmatprep.mubr.bf16.mxu0 %v219
    %866 = vmatmul.mubr.bf16.gmra.mxu0 %v218
    %v867 = vpop.f32.mrf.mxu0
    %v868 = vadd.f32 %v825, %v867
    %v869 = vpop.f32.mrf.mxu0
    %v870 = vadd.f32 %v827, %v869
    %v871 = vpop.f32.mrf.mxu0
    %v872 = vadd.f32 %v829, %v871
    %v873 = vpop.f32.mrf.mxu0
    %v874 = vadd.f32 %v831, %v873
    %875 = vdwg.mxu0
    %876 = vmatprep.subr.bf16.mxu0 %v645
    %877 = vmatpush1.bf16.msra.mxu0 %v644
    %878 = vmatprep.subr.bf16.mxu0 %v643
    %879 = vmatpush1.bf16.msra.mxu0 %v642
    %880 = vmatprep.subr.bf16.mxu0 %v641
    %881 = vmatpush1.bf16.msra.mxu0 %v640
    %882 = vmatprep.subr.bf16.mxu0 %v639
    %883 = vmatpush1.bf16.msra.mxu0 %v638
    %884 = vmatprep.subr.bf16.mxu0 %v637
    %885 = vmatpush1.bf16.msra.mxu0 %v636
    %886 = vmatprep.subr.bf16.mxu0 %v635
    %887 = vmatpush1.bf16.msra.mxu0 %v634
    %888 = vmatprep.subr.bf16.mxu0 %v633
    %889 = vmatpush1.bf16.msra.mxu0 %v632
    %890 = vmatprep.subr.bf16.mxu0 %v631
    %891 = vmatpush1.bf16.msra.mxu0 %v630
    %892 = vmatprep.subr.bf16.mxu0 %v661
    %893 = vmatpush2.bf16.msra.mxu0 %v660
    %894 = vmatprep.subr.bf16.mxu0 %v659
    %895 = vmatpush2.bf16.msra.mxu0 %v658
    %896 = vmatprep.subr.bf16.mxu0 %v657
    %897 = vmatpush2.bf16.msra.mxu0 %v656
    %898 = vmatprep.subr.bf16.mxu0 %v655
    %899 = vmatpush2.bf16.msra.mxu0 %v654
    %900 = vmatprep.subr.bf16.mxu0 %v653
    %901 = vmatpush2.bf16.msra.mxu0 %v652
    %902 = vmatprep.subr.bf16.mxu0 %v651
    %903 = vmatpush2.bf16.msra.mxu0 %v650
    %904 = vmatprep.subr.bf16.mxu0 %v649
    %905 = vmatpush2.bf16.msra.mxu0 %v648
    %906 = vmatprep.subr.bf16.mxu0 %v647
    %907 = vmatpush2.bf16.msra.mxu0 %v646
    %908 = vmatprep.mubr.bf16.mxu0 %v221
    %909 = vmatmul.mubr.bf16.gmra.mxu0 %v220
    %v910 = vpop.f32.mrf.mxu0
    %v911 = vadd.f32 %v868, %v910
    %v912 = vpop.f32.mrf.mxu0
    %v913 = vadd.f32 %v870, %v912
    %v914 = vpop.f32.mrf.mxu0
    %v915 = vadd.f32 %v872, %v914
    %v916 = vpop.f32.mrf.mxu0
    %v917 = vadd.f32 %v874, %v916
    %918 = vdwg.mxu0
    %919 = vmatprep.subr.bf16.mxu0 %v677
    %920 = vmatpush1.bf16.msra.mxu0 %v676
    %921 = vmatprep.subr.bf16.mxu0 %v675
    %922 = vmatpush1.bf16.msra.mxu0 %v674
    %923 = vmatprep.subr.bf16.mxu0 %v673
    %924 = vmatpush1.bf16.msra.mxu0 %v672
    %925 = vmatprep.subr.bf16.mxu0 %v671
    %926 = vmatpush1.bf16.msra.mxu0 %v670
    %927 = vmatprep.subr.bf16.mxu0 %v669
    %928 = vmatpush1.bf16.msra.mxu0 %v668
    %929 = vmatprep.subr.bf16.mxu0 %v667
    %930 = vmatpush1.bf16.msra.mxu0 %v666
    %931 = vmatprep.subr.bf16.mxu0 %v665
    %932 = vmatpush1.bf16.msra.mxu0 %v664
    %933 = vmatprep.subr.bf16.mxu0 %v663
    %934 = vmatpush1.bf16.msra.mxu0 %v662
    %935 = vmatprep.subr.bf16.mxu0 0
    %936 = vmatpush2.bf16.msra.mxu0 0
    %937 = vmatprep.subr.bf16.mxu0 0
    %938 = vmatpush2.bf16.msra.mxu0 0
    %939 = vmatprep.subr.bf16.mxu0 0
    %940 = vmatpush2.bf16.msra.mxu0 0
    %941 = vmatprep.subr.bf16.mxu0 0
    %942 = vmatpush2.bf16.msra.mxu0 0
    %943 = vmatprep.subr.bf16.mxu0 0
    %944 = vmatpush2.bf16.msra.mxu0 0
    %945 = vmatprep.subr.bf16.mxu0 0
    %946 = vmatpush2.bf16.msra.mxu0 0
    %947 = vmatprep.subr.bf16.mxu0 0
    %948 = vmatpush2.bf16.msra.mxu0 0
    %949 = vmatprep.subr.bf16.mxu0 0
    %950 = vmatpush2.bf16.msra.mxu0 0
    %951 = vmatprep.mubr.bf16.mxu0 0
    %952 = vmatmul.mubr.bf16.gmra.mxu0 %v222
    %v953 = vpop.f32.mrf.mxu0
    %v954 = vadd.f32 %v911, %v953
    %v955 = vpop.f32.mrf.mxu0
    %v956 = vadd.f32 %v913, %v955
    %v957 = vpop.f32.mrf.mxu0
    %v958 = vadd.f32 %v915, %v957
    %v959 = vpop.f32.mrf.mxu0
    %v960 = vadd.f32 %v917, %v959
    %961 = vdwg.mxu0
    %v962 = vmax.f32 %v954, 0.0
    %v963 = vmax.f32 %v956, 0.0
    %v964 = vmax.f32 %v958, 0.0
    %v965 = vmax.f32 %v960, 0.0
    %v966 = vld [vmem:[%s7] sm:$0xff]
    %v967 = vld [vmem:[%s7 + $0x8] sm:$0xff]
    %v968 = vld [vmem:[%s7 + $0x10] sm:$0xff]
    %v969 = vld [vmem:[%s7 + $0x18] sm:$0xff]
    %vm970 = vcmp.gt.f32.partialorder %v966, 0.2
    %vm971 = vcmp.gt.f32.partialorder %v967, 0.2
    %vm972 = vcmp.gt.f32.partialorder %v968, 0.2
    %vm973 = vcmp.gt.f32.partialorder %v969, 0.2
    %v974 = vsel %vm970, %v962, 0.0
    %v975 = vsel %vm971, %v963, 0.0
    %v976 = vsel %vm972, %v964, 0.0
    %v977 = vsel %vm973, %v965, 0.0
    %v978 = vpack.c.bf16 %v976, %v974
    %v979 = vpack.c.bf16 %v977, %v975
    %v980 = vld [vmem:[#allocation5] sm:$0xff]
    %v981 = vld [vmem:[#allocation5 + $0x8] sm:$0xff]
    %v982 = vld [vmem:[#allocation5 + $0x10] sm:$0xff]
    %v983 = vld [vmem:[#allocation5 + $0x18] sm:$0xff]
    %v984 = vld [vmem:[#allocation5 + $0x20] sm:$0xff]
    %v985 = vld [vmem:[#allocation5 + $0x28] sm:$0xff]
    %v986 = vld [vmem:[#allocation5 + $0x30] sm:$0xff]
    %v987 = vld [vmem:[#allocation5 + $0x38] sm:$0xff]
    %v988 = vld [vmem:[#allocation5 + $0x40] sm:$0xff]
    %v989 = vld [vmem:[#allocation5 + $0x48] sm:$0xff]
    %v990 = vld [vmem:[#allocation5 + $0x50] sm:$0xff]
    %v991 = vld [vmem:[#allocation5 + $0x58] sm:$0xff]
    %v992 = vld [vmem:[#allocation5 + $0x60] sm:$0xff]
    %v993 = vld [vmem:[#allocation5 + $0x68] sm:$0xff]
    %v994 = vld [vmem:[#allocation5 + $0x70] sm:$0xff]
    %v995 = vld [vmem:[#allocation5 + $0x78] sm:$0xff]
    %v996 = vld [vmem:[#allocation5 + $0x80] sm:$0xff]
    %v997 = vld [vmem:[#allocation5 + $0x88] sm:$0xff]
    %v998 = vld [vmem:[#allocation5 + $0x90] sm:$0xff]
    %v999 = vld [vmem:[#allocation5 + $0x98] sm:$0xff]
    %v1000 = vld [vmem:[#allocation5 + $0xa0] sm:$0xff]
    %v1001 = vld [vmem:[#allocation5 + $0xa8] sm:$0xff]
    %v1002 = vld [vmem:[#allocation5 + $0xb0] sm:$0xff]
    %v1003 = vld [vmem:[#allocation5 + $0xb8] sm:$0xff]
    %v1004 = vld [vmem:[#allocation5 + $0xc0] sm:$0xff]
    %v1005 = vld [vmem:[#allocation5 + $0xc8] sm:$0xff]
    %v1006 = vld [vmem:[#allocation5 + $0xd0] sm:$0xff]
    %v1007 = vld [vmem:[#allocation5 + $0xd8] sm:$0xff]
    %v1008 = vld [vmem:[#allocation5 + $0xe0] sm:$0xff]
    %v1009 = vld [vmem:[#allocation5 + $0xe8] sm:$0xff]
    %v1010 = vld [vmem:[#allocation5 + $0xf0] sm:$0xff]
    %v1011 = vld [vmem:[#allocation5 + $0xf8] sm:$0xff]
    %v1012 = vld [vmem:[%s4] sm:$0x3]
    %v1014 = vlaneseq
    %v1015 = vshrl.u32 %v1014, 7
    %v1016 = vsub.s32 0, %v1015
    %v1017 = vrot.slane %v1012, %v1016
    %v1018 = vlaneseq
    %v1019 = vshrl.u32 %v1018, 7
    %v1020 = vsub.s32 1, %v1019
    %v1021 = vrot.slane %v1012, %v1020
    %v1056 = vunpack.c.l.b16 %v980
    %v1057 = vunpack.c.h.b16 %v980
    %v1058 = vunpack.c.l.b16 %v981
    %v1059 = vunpack.c.h.b16 %v981
    %v1060 = vunpack.c.l.b16 %v982
    %v1061 = vunpack.c.h.b16 %v982
    %v1062 = vunpack.c.l.b16 %v983
    %v1063 = vunpack.c.h.b16 %v983
    %v1064 = vunpack.c.l.b16 %v984
    %v1065 = vunpack.c.h.b16 %v984
    %v1066 = vunpack.c.l.b16 %v985
    %v1067 = vunpack.c.h.b16 %v985
    %v1068 = vunpack.c.l.b16 %v986
    %v1069 = vunpack.c.h.b16 %v986
    %v1070 = vunpack.c.l.b16 %v987
    %v1071 = vunpack.c.h.b16 %v987
    %v1072 = vunpack.c.l.b16 %v988
    %v1073 = vunpack.c.h.b16 %v988
    %v1074 = vunpack.c.l.b16 %v989
    %v1075 = vunpack.c.h.b16 %v989
    %v1076 = vunpack.c.l.b16 %v990
    %v1077 = vunpack.c.h.b16 %v990
    %v1078 = vunpack.c.l.b16 %v991
    %v1079 = vunpack.c.h.b16 %v991
    %v1080 = vunpack.c.l.b16 %v992
    %v1081 = vunpack.c.h.b16 %v992
    %v1082 = vunpack.c.l.b16 %v993
    %v1083 = vunpack.c.h.b16 %v993
    %v1084 = vunpack.c.l.b16 %v994
    %v1085 = vunpack.c.h.b16 %v994
    %v1086 = vunpack.c.l.b16 %v995
    %v1087 = vunpack.c.h.b16 %v995
    %v1088 = vunpack.c.l.b16 %v996
    %v1089 = vunpack.c.h.b16 %v996
    %v1090 = vunpack.c.l.b16 %v997
    %v1091 = vunpack.c.h.b16 %v997
    %v1092 = vunpack.c.l.b16 %v998
    %v1093 = vunpack.c.h.b16 %v998
    %v1094 = vunpack.c.l.b16 %v999
    %v1095 = vunpack.c.h.b16 %v999
    %v1096 = vunpack.c.l.b16 %v1000
    %v1097 = vunpack.c.h.b16 %v1000
    %v1098 = vunpack.c.l.b16 %v1001
    %v1099 = vunpack.c.h.b16 %v1001
    %v1100 = vunpack.c.l.b16 %v1002
    %v1101 = vunpack.c.h.b16 %v1002
    %v1102 = vunpack.c.l.b16 %v1003
    %v1103 = vunpack.c.h.b16 %v1003
    %v1104 = vunpack.c.l.b16 %v1004
    %v1105 = vunpack.c.h.b16 %v1004
    %v1106 = vunpack.c.l.b16 %v1005
    %v1107 = vunpack.c.h.b16 %v1005
    %v1108 = vunpack.c.l.b16 %v1006
    %v1109 = vunpack.c.h.b16 %v1006
    %v1110 = vunpack.c.l.b16 %v1007
    %v1111 = vunpack.c.h.b16 %v1007
    %v1112 = vunpack.c.l.b16 %v1008
    %v1113 = vunpack.c.h.b16 %v1008
    %v1114 = vunpack.c.l.b16 %v1009
    %v1115 = vunpack.c.h.b16 %v1009
    %v1116 = vunpack.c.l.b16 %v1010
    %v1117 = vunpack.c.h.b16 %v1010
    %v1118 = vunpack.c.l.b16 %v1011
    %v1119 = vunpack.c.h.b16 %v1011
    %v1120 = vpack.c.b16 %v1058, %v1056
    %v1121 = vpack.c.b16 %v1059, %v1057
    %v1122 = vpack.c.b16 %v1062, %v1060
    %v1123 = vpack.c.b16 %v1063, %v1061
    %v1124 = vpack.c.b16 %v1066, %v1064
    %v1125 = vpack.c.b16 %v1067, %v1065
    %v1126 = vpack.c.b16 %v1070, %v1068
    %v1127 = vpack.c.b16 %v1071, %v1069
    %v1128 = vpack.c.b16 %v1074, %v1072
    %v1129 = vpack.c.b16 %v1075, %v1073
    %v1130 = vpack.c.b16 %v1078, %v1076
    %v1131 = vpack.c.b16 %v1079, %v1077
    %v1132 = vpack.c.b16 %v1082, %v1080
    %v1133 = vpack.c.b16 %v1083, %v1081
    %v1134 = vpack.c.b16 %v1086, %v1084
    %v1135 = vpack.c.b16 %v1087, %v1085
    %v1136 = vpack.c.b16 %v1090, %v1088
    %v1137 = vpack.c.b16 %v1091, %v1089
    %v1138 = vpack.c.b16 %v1094, %v1092
    %v1139 = vpack.c.b16 %v1095, %v1093
    %v1140 = vpack.c.b16 %v1098, %v1096
    %v1141 = vpack.c.b16 %v1099, %v1097
    %v1142 = vpack.c.b16 %v1102, %v1100
    %v1143 = vpack.c.b16 %v1103, %v1101
    %v1144 = vpack.c.b16 %v1106, %v1104
    %v1145 = vpack.c.b16 %v1107, %v1105
    %v1146 = vpack.c.b16 %v1110, %v1108
    %v1147 = vpack.c.b16 %v1111, %v1109
    %v1148 = vpack.c.b16 %v1114, %v1112
    %v1149 = vpack.c.b16 %v1115, %v1113
    %v1150 = vpack.c.b16 %v1118, %v1116
    %v1151 = vpack.c.b16 %v1119, %v1117
    %1184 = vmatprep.subr.bf16.mxu0 %v1135
    %1185 = vmatpush1.bf16.msra.mxu0 %v1134
    %1186 = vmatprep.subr.bf16.mxu0 %v1133
    %1187 = vmatpush1.bf16.msra.mxu0 %v1132
    %1188 = vmatprep.subr.bf16.mxu0 %v1131
    %1189 = vmatpush1.bf16.msra.mxu0 %v1130
    %1190 = vmatprep.subr.bf16.mxu0 %v1129
    %1191 = vmatpush1.bf16.msra.mxu0 %v1128
    %1192 = vmatprep.subr.bf16.mxu0 %v1127
    %1193 = vmatpush1.bf16.msra.mxu0 %v1126
    %1194 = vmatprep.subr.bf16.mxu0 %v1125
    %1195 = vmatpush1.bf16.msra.mxu0 %v1124
    %1196 = vmatprep.subr.bf16.mxu0 %v1123
    %1197 = vmatpush1.bf16.msra.mxu0 %v1122
    %1198 = vmatprep.subr.bf16.mxu0 %v1121
    %1199 = vmatpush1.bf16.msra.mxu0 %v1120
    %1200 = vmatprep.subr.bf16.mxu0 %v1151
    %1201 = vmatpush2.bf16.msra.mxu0 %v1150
    %1202 = vmatprep.subr.bf16.mxu0 %v1149
    %1203 = vmatpush2.bf16.msra.mxu0 %v1148
    %1204 = vmatprep.subr.bf16.mxu0 %v1147
    %1205 = vmatpush2.bf16.msra.mxu0 %v1146
    %1206 = vmatprep.subr.bf16.mxu0 %v1145
    %1207 = vmatpush2.bf16.msra.mxu0 %v1144
    %1208 = vmatprep.subr.bf16.mxu0 %v1143
    %1209 = vmatpush2.bf16.msra.mxu0 %v1142
    %1210 = vmatprep.subr.bf16.mxu0 %v1141
    %1211 = vmatpush2.bf16.msra.mxu0 %v1140
    %1212 = vmatprep.subr.bf16.mxu0 %v1139
    %1213 = vmatpush2.bf16.msra.mxu0 %v1138
    %1214 = vmatprep.subr.bf16.mxu0 %v1137
    %1215 = vmatpush2.bf16.msra.mxu0 %v1136
    %1216 = vmatprep.mubr.bf16.mxu0 %v979
    %1217 = vmatmul.mubr.bf16.gmra.mxu0 %v978
    %v1218 = vpop.f32.mrf.mxu0
    %v1219 = vadd.f32 %v1017, %v1218
    %v1220 = vpop.f32.mrf.mxu0
    %v1221 = vadd.f32 %v1021, %v1220
    %v1222 = vpop.f32.mrf.mxu0
    %v1223 = vadd.f32 %v1017, %v1222
    %v1224 = vpop.f32.mrf.mxu0
    %v1225 = vadd.f32 %v1021, %v1224
    %1226 = vdwg.mxu0
    %v1227 = vmax.f32 %v1219, 0.0
    %v1228 = vmax.f32 %v1221, 0.0
    %v1229 = vmax.f32 %v1223, 0.0
    %v1230 = vmax.f32 %v1225, 0.0
    %v1231 = vld [vmem:[%s8] sm:$0xff]
    %v1232 = vld [vmem:[%s8 + $0x8] sm:$0xff]
    %v1233 = vld [vmem:[%s8 + $0x10] sm:$0xff]
    %v1234 = vld [vmem:[%s8 + $0x18] sm:$0xff]
    %vm1235 = vcmp.gt.f32.partialorder %v1231, 0.5
    %vm1236 = vcmp.gt.f32.partialorder %v1232, 0.5
    %vm1237 = vcmp.gt.f32.partialorder %v1233, 0.5
    %vm1238 = vcmp.gt.f32.partialorder %v1234, 0.5
    %v1239 = vsel %vm1235, %v1227, 0.0
    %v1240 = vsel %vm1236, %v1228, 0.0
    %v1241 = vsel %vm1237, %v1229, 0.0
    %v1242 = vsel %vm1238, %v1230, 0.0
    %v1243 = vpack.c.bf16 %v1241, %v1239
    %v1244 = vpack.c.bf16 %v1242, %v1240
    %v1245 = vld [vmem:[%s5] sm:$0xf]
    %v1246 = vld [vmem:[%s5 + $0x4] sm:$0xf]
    %v1247 = vld [vmem:[%s5 + $0x8] sm:$0xf]
    %v1248 = vld [vmem:[%s5 + $0xc] sm:$0xf]
    %v1249 = vld [vmem:[%s5 + $0x10] sm:$0xf]
    %v1250 = vld [vmem:[%s5 + $0x14] sm:$0xf]
    %v1251 = vld [vmem:[%s5 + $0x18] sm:$0xf]
    %v1252 = vld [vmem:[%s5 + $0x1c] sm:$0xf]
    %v1253 = vld [vmem:[%s5 + $0x20] sm:$0xf]
    %v1254 = vld [vmem:[%s5 + $0x24] sm:$0xf]
    %v1255 = vld [vmem:[%s5 + $0x28] sm:$0xf]
    %v1256 = vld [vmem:[%s5 + $0x2c] sm:$0xf]
    %v1257 = vld [vmem:[%s5 + $0x30] sm:$0xf]
    %v1258 = vld [vmem:[%s5 + $0x34] sm:$0xf]
    %v1259 = vld [vmem:[%s5 + $0x38] sm:$0xf]
    %v1260 = vld [vmem:[%s5 + $0x3c] sm:$0xf]
    %v1261 = vld [vmem:[%s5 + $0x40] sm:$0xf]
    %v1262 = vld [vmem:[%s5 + $0x44] sm:$0xf]
    %v1263 = vld [vmem:[%s5 + $0x48] sm:$0xf]
    %v1264 = vld [vmem:[%s5 + $0x4c] sm:$0xf]
    %v1265 = vld [vmem:[%s5 + $0x50] sm:$0xf]
    %v1266 = vld [vmem:[%s5 + $0x54] sm:$0xf]
    %v1267 = vld [vmem:[%s5 + $0x58] sm:$0xf]
    %v1268 = vld [vmem:[%s5 + $0x5c] sm:$0xf]
    %v1269 = vld [vmem:[%s5 + $0x60] sm:$0xf]
    %v1270 = vld [vmem:[%s5 + $0x64] sm:$0xf]
    %v1271 = vld [vmem:[%s5 + $0x68] sm:$0xf]
    %v1272 = vld [vmem:[%s5 + $0x6c] sm:$0xf]
    %v1273 = vld [vmem:[%s5 + $0x70] sm:$0xf]
    %v1274 = vld [vmem:[%s5 + $0x74] sm:$0xf]
    %v1275 = vld [vmem:[%s5 + $0x78] sm:$0xf]
    %v1276 = vld [vmem:[%s5 + $0x7c] sm:$0xf]
    %v1277 = vld [vmem:[%s6] sm:$0x1]
    %v1279 = vlaneseq
    %v1280 = vshrl.u32 %v1279, 7
    %v1281 = vsub.s32 0, %v1280
    %v1282 = vrot.slane %v1277, %v1281
    %v1316 = vunpack.c.l.b16 %v1245
    %v1317 = vunpack.c.l.b16 %v1246
    %v1318 = vunpack.c.l.b16 %v1247
    %v1319 = vunpack.c.l.b16 %v1248
    %v1320 = vunpack.c.l.b16 %v1249
    %v1321 = vunpack.c.l.b16 %v1250
    %v1322 = vunpack.c.l.b16 %v1251
    %v1323 = vunpack.c.l.b16 %v1252
    %v1324 = vunpack.c.l.b16 %v1253
    %v1325 = vunpack.c.l.b16 %v1254
    %v1326 = vunpack.c.l.b16 %v1255
    %v1327 = vunpack.c.l.b16 %v1256
    %v1328 = vunpack.c.l.b16 %v1257
    %v1329 = vunpack.c.l.b16 %v1258
    %v1330 = vunpack.c.l.b16 %v1259
    %v1331 = vunpack.c.l.b16 %v1260
    %v1332 = vunpack.c.l.b16 %v1261
    %v1333 = vunpack.c.l.b16 %v1262
    %v1334 = vunpack.c.l.b16 %v1263
    %v1335 = vunpack.c.l.b16 %v1264
    %v1336 = vunpack.c.l.b16 %v1265
    %v1337 = vunpack.c.l.b16 %v1266
    %v1338 = vunpack.c.l.b16 %v1267
    %v1339 = vunpack.c.l.b16 %v1268
    %v1340 = vunpack.c.l.b16 %v1269
    %v1341 = vunpack.c.l.b16 %v1270
    %v1342 = vunpack.c.l.b16 %v1271
    %v1343 = vunpack.c.l.b16 %v1272
    %v1344 = vunpack.c.l.b16 %v1273
    %v1345 = vunpack.c.l.b16 %v1274
    %v1346 = vunpack.c.l.b16 %v1275
    %v1347 = vunpack.c.l.b16 %v1276
    %v1348 = vpack.c.b16 %v1317, %v1316
    %v1349 = vpack.c.b16 %v1319, %v1318
    %v1350 = vpack.c.b16 %v1321, %v1320
    %v1351 = vpack.c.b16 %v1323, %v1322
    %v1352 = vpack.c.b16 %v1325, %v1324
    %v1353 = vpack.c.b16 %v1327, %v1326
    %v1354 = vpack.c.b16 %v1329, %v1328
    %v1355 = vpack.c.b16 %v1331, %v1330
    %v1356 = vpack.c.b16 %v1333, %v1332
    %v1357 = vpack.c.b16 %v1335, %v1334
    %v1358 = vpack.c.b16 %v1337, %v1336
    %v1359 = vpack.c.b16 %v1339, %v1338
    %v1360 = vpack.c.b16 %v1341, %v1340
    %v1361 = vpack.c.b16 %v1343, %v1342
    %v1362 = vpack.c.b16 %v1345, %v1344
    %v1363 = vpack.c.b16 %v1347, %v1346
    %1380 = vmatprep.subr.bf16.mxu0 0
    %1381 = vmatpush1.bf16.msra.mxu0 %v1355
    %1382 = vmatprep.subr.bf16.mxu0 0
    %1383 = vmatpush1.bf16.msra.mxu0 %v1354
    %1384 = vmatprep.subr.bf16.mxu0 0
    %1385 = vmatpush1.bf16.msra.mxu0 %v1353
    %1386 = vmatprep.subr.bf16.mxu0 0
    %1387 = vmatpush1.bf16.msra.mxu0 %v1352
    %1388 = vmatprep.subr.bf16.mxu0 0
    %1389 = vmatpush1.bf16.msra.mxu0 %v1351
    %1390 = vmatprep.subr.bf16.mxu0 0
    %1391 = vmatpush1.bf16.msra.mxu0 %v1350
    %1392 = vmatprep.subr.bf16.mxu0 0
    %1393 = vmatpush1.bf16.msra.mxu0 %v1349
    %1394 = vmatprep.subr.bf16.mxu0 0
    %1395 = vmatpush1.bf16.msra.mxu0 %v1348
    %1396 = vmatprep.subr.bf16.mxu0 0
    %1397 = vmatpush2.bf16.msra.mxu0 %v1363
    %1398 = vmatprep.subr.bf16.mxu0 0
    %1399 = vmatpush2.bf16.msra.mxu0 %v1362
    %1400 = vmatprep.subr.bf16.mxu0 0
    %1401 = vmatpush2.bf16.msra.mxu0 %v1361
    %1402 = vmatprep.subr.bf16.mxu0 0
    %1403 = vmatpush2.bf16.msra.mxu0 %v1360
    %1404 = vmatprep.subr.bf16.mxu0 0
    %1405 = vmatpush2.bf16.msra.mxu0 %v1359
    %1406 = vmatprep.subr.bf16.mxu0 0
    %1407 = vmatpush2.bf16.msra.mxu0 %v1358
    %1408 = vmatprep.subr.bf16.mxu0 0
    %1409 = vmatpush2.bf16.msra.mxu0 %v1357
    %1410 = vmatprep.subr.bf16.mxu0 0
    %1411 = vmatpush2.bf16.msra.mxu0 %v1356
    %1412 = vmatprep.mubr.bf16.mxu0 %v1244
    %1413 = vmatmul.mubr.bf16.gmra.mxu0 %v1243
    %v1414 = vpop.f32.mrf.mxu0
    %v1415 = vadd.f32 %v1282, %v1414
    %v1416 = vpop.f32.mrf.mxu0
    %v1417 = vpop.f32.mrf.mxu0
    %v1418 = vadd.f32 %v1282, %v1417
    %v1419 = vpop.f32.mrf.mxu0
    %1420 = vdwg.mxu0
    %vm1421 = vcmask 80896
    %1422 = vst.msk [vmem:[#allocation7] sm:$0xff] %vm1421, %v1415
    %1423 = vst.msk [vmem:[#allocation7 + $0x8] sm:$0xff] %vm1421, %v1418
    // Predicated region
    $region46: #{tpu_custom_call.1} parent=1 // pred_check
      _
    $region47: #{tpu_custom_call.1} parent=1 // pred_check_branch
      %1425 = sbr.rel (0) target = $region49
    $region48: #{tpu_custom_call.1} parent=1 // pred_region
      %s1427 = ssub.s32 256, 256
      %1428 = vsyncadd [#allocation4], %s1427
      %s1429 = sshll.u32 [#allocation7], 4
      %s1430 = int_to_ptr.vmem [resolvable:$true] %s1429
      %1435 = dma.vmem_to_hbm [thread:$0]  %s1430, 256, %s9, [#allocation4], 128, 128, 8
    $region49: #{tpu_custom_call.1} parent=1 // pred_fallthru
      _
    // Predicated region
    $region50: #{tpu_custom_call.1} parent=1 // pred_check
      _
    $region51: #{tpu_custom_call.1} parent=1 // pred_check_branch
      %1437 = sbr.rel (0) target = $region53
    $region52: #{tpu_custom_call.1} parent=1 // pred_region
      %1438 = dma.done [#allocation4], 256
    $region53: #{tpu_custom_call.1} parent=1 // pred_fallthru
      _
    %1439 = vsyncpa [#allocation3], 1
    %1440 = vsyncpa [#allocation6], 1
    %1441 = vsyncpa [#allocation4], 1

</llo_original>
